<compile_context>
chip_gen: v7x
topology: tpu7x:2x2x1
jax: 0.10.0
libtpu: 0.0.40
codegen_flags: <defaults>
</compile_context>

<pallas_src>
import functools
import math

import jax
import jax.numpy as jnp
from jax.experimental import pallas as pl
from jax.experimental.pallas import tpu as pltpu

_LANES = 128
_SUBLANES = 8
_MAX_BLOCK_ROWS = 8192                 # 8192*128*4B = 4 MiB f32 per input block
_VMEM_BUDGET_BYTES = 24 * 1024 * 1024  # conservative block-sizing budget
_VMEM_LIMIT_BYTES = 48 * 1024 * 1024   # scoped VMEM limit (safe on v5e/v6e/v7x)
_MIN_PALLAS_ELEMS = 128 * 1024         # below this a fused XLA reduction wins
_LOG2 = math.log(2.0)

# canonical statistic order (row-slab order inside the kernel output)
_STAT_ORDER = ("sq", "abs", "huber", "logcosh", "fmse", "p", "t", "pt", "pp", "tt")

# which statistics each loss type needs
_LOSS_STATS = {
    "MSE": ("sq",),
    "MAE": ("abs",),
    "Huber": ("huber",),
    "LogCosh": ("logcosh",),
    "FMSE": ("fmse",),
    "PCC": ("p", "t", "pt", "pp", "tt"),
    "CCC": ("p", "t", "pt", "pp", "tt"),
    "Cosine": ("pt", "pp", "tt"),
}


def _cdiv(a, b):
    return -(-a // b)


def _elem_stats(p, t, needed):
    """Element-wise statistic terms for `needed` stats, in _STAT_ORDER order.

    p / t must already be float32.
    """
    out = {}
    need_d = any(s in needed for s in ("sq", "abs", "huber", "logcosh", "fmse"))
    d = (p - t) if need_d else None
    need_ad = any(s in needed for s in ("abs", "huber", "logcosh", "fmse"))
    ad = jnp.abs(d) if need_ad else None
    need_sq = any(s in needed for s in ("sq", "huber", "fmse"))
    sq = (d * d) if need_sq else None

    if "sq" in needed:
        out["sq"] = sq
    if "abs" in needed:
        out["abs"] = ad
    if "huber" in needed:                               # F.huber_loss, delta=1
        out["huber"] = jnp.where(ad < 1.0, 0.5 * sq, ad - 0.5)
    if "logcosh" in needed:                             # stable log(cosh(d))
        out["logcosh"] = ad + jnp.log1p(jnp.exp(-2.0 * ad)) - _LOG2
    if "fmse" in needed:                                # sigmoid, beta=0.2, gamma=1
        out["fmse"] = sq * (2.0 * jax.nn.sigmoid(0.2 * ad) - 1.0)
    if "p" in needed:
        out["p"] = p
    if "t" in needed:
        out["t"] = t
    if "pt" in needed:
        out["pt"] = p * t
    if "pp" in needed:
        out["pp"] = p * p
    if "tt" in needed:
        out["tt"] = t * t
    return [out[s] for s in _STAT_ORDER if s in needed]


def _stats_kernel(p_ref, t_ref, o_ref, *, needed):
    """Streaming reduction: accumulate per-stat (8, 128) partials into o_ref.

    o_ref shape: (n_stats, 8, 128), resident across the reduction grid axis.
    """
    step = pl.program_id(0)

    @pl.when(step == 0)
    def _():
        o_ref[...] = jnp.zeros_like(o_ref)

    # upcast in-kernel (inputs streamed from HBM in their original dtype)
    p = p_ref[...].astype(jnp.float32)
    t = t_ref[...].astype(jnp.float32)

    terms = _elem_stats(p, t, needed)
    for i, x in enumerate(terms):
        # (block_rows, 128) -> (block_rows//8, 8, 128); leading-axis tree-add is
        # pure VPU vreg adds (no XLU sublane reduce, no concat shuffles).
        o_ref[i, :, :] += jnp.sum(x.reshape(-1, _SUBLANES, _LANES), axis=0)


def _pick_block_rows(n_stats, in_itemsize, rows_avail):
    """Size the block so double-buffered inputs + stat temporaries fit VMEM."""
    per_row = _LANES * (2 * 2 * in_itemsize            # 2 inputs, double-buffered
                        + (n_stats + 6) * 4)           # f32 stat/interm. temporaries
    br = _VMEM_BUDGET_BYTES // per_row
    br = min(br, _MAX_BLOCK_ROWS, rows_avail)
    br = max(_SUBLANES, (br // _SUBLANES) * _SUBLANES)
    return int(br)


def _compute_stats_jnp(pred_flat, target_flat, needed):
    """Small-N / tail path: fused XLA reductions (same math as the kernel)."""
    p = pred_flat.astype(jnp.float32)
    t = target_flat.astype(jnp.float32)
    terms = _elem_stats(p, t, needed)
    ordered = [s for s in _STAT_ORDER if s in needed]
    return {name: jnp.sum(x) for name, x in zip(ordered, terms)}


def _compute_stats(pred_flat, target_flat, needed, min_pallas_elems):
    """Returns {stat_name: scalar sum} over all n elements."""
    n = pred_flat.shape[0]
    rows_avail = n // _LANES
    if n < max(min_pallas_elems, _SUBLANES * _LANES) or rows_avail < _SUBLANES:
        return _compute_stats_jnp(pred_flat, target_flat, needed)

    n_stats = len(needed)
    in_itemsize = max(jnp.dtype(pred_flat.dtype).itemsize,
                      jnp.dtype(target_flat.dtype).itemsize)
    block_rows = _pick_block_rows(n_stats, in_itemsize, rows_avail)
    steps = rows_avail // block_rows
    if steps == 0:
        return _compute_stats_jnp(pred_flat, target_flat, needed)
    main_rows = steps * block_rows
    main_elems = main_rows * _LANES

    if n % _LANES == 0:
        # Copy-free view; kernel only addresses the first main_rows rows.
        def as2d(x):
            return x.reshape(rows_avail, _LANES)
    else:
        # Unavoidable prefix slice-copy for non-128-multiple lengths.
        def as2d(x):
            return x[:main_elems].reshape(main_rows, _LANES)

    p2 = as2d(pred_flat)
    t2 = as2d(target_flat)

    eup_per_elem = (2 if "logcosh" in needed else 0) + (1 if "fmse" in needed else 0)
    cost = pl.CostEstimate(
        flops=int(main_elems) * (3 * n_stats + 2),
        transcendentals=int(main_elems) * eup_per_elem,
        bytes_accessed=2 * int(main_elems) * in_itemsize
        + n_stats * _SUBLANES * _LANES * 4,
    )

    kernel = functools.partial(_stats_kernel, needed=needed)

    slab = pl.pallas_call(
        kernel,
        out_shape=jax.ShapeDtypeStruct((n_stats, _SUBLANES, _LANES), jnp.float32),
        grid_spec=pltpu.PrefetchScalarGridSpec(
            num_scalar_prefetch=0,
            grid=(steps,),
            in_specs=[
                pl.BlockSpec((block_rows, _LANES), lambda s: (s, 0)),
                pl.BlockSpec((block_rows, _LANES), lambda s: (s, 0)),
            ],
            out_specs=pl.BlockSpec((n_stats, _SUBLANES, _LANES),
                                   lambda s: (0, 0, 0)),
        ),
        compiler_params=pltpu.CompilerParams(
            dimension_semantics=("arbitrary",),
            vmem_limit_bytes=_VMEM_LIMIT_BYTES,
        ),
        cost_estimate=cost,
    )(p2, t2)

    sums = jnp.sum(slab, axis=(1, 2))                   # (n_stats,), glue reduce
    ordered = [s for s in _STAT_ORDER if s in needed]
    stats = {name: sums[i] for i, name in enumerate(ordered)}

    # Fold the ragged tail (rows not covered by full blocks + sub-128 remainder).
    if main_elems < n:
        tail = _compute_stats_jnp(pred_flat[main_elems:], target_flat[main_elems:],
                                  needed)
        stats = {k: stats[k] + tail[k] for k in stats}
    return stats


def _losses_from_stats(stats, n, loss_types):
    N = jnp.float32(n)
    out = {}
    for lt in loss_types:
        if lt == "MSE":
            out[lt] = stats["sq"] / N
        elif lt == "MAE":
            out[lt] = stats["abs"] / N
        elif lt == "Huber":
            out[lt] = stats["huber"] / N
        elif lt == "LogCosh":
            out[lt] = stats["logcosh"] / N
        elif lt == "FMSE":
            out[lt] = stats["fmse"] / N
        elif lt in ("PCC", "CCC"):
            mean_p = stats["p"] / N
            mean_t = stats["t"] / N
            # Pearson correlation (torch.corrcoef); denominators cancel, so use
            # population moments. NaN (zero variance) remapped to 1.0 as in torch ref.
            cov = stats["pt"] / N - mean_p * mean_t
            varp_pop = stats["pp"] / N - mean_p * mean_p
            vart_pop = stats["tt"] / N - mean_t * mean_t
            cor = cov / jnp.sqrt(varp_pop * vart_pop)
            cor = jnp.where(jnp.isnan(cor), jnp.float32(1.0), cor)
            if lt == "PCC":
                out[lt] = 1.0 - cor
            else:
                # unbiased variance / std (torch.var / torch.std defaults)
                denom = jnp.maximum(N - 1.0, 1.0)
                var_t = (stats["tt"] - N * mean_t * mean_t) / denom
                var_p = (stats["pp"] - N * mean_p * mean_p) / denom
                sd_t = jnp.sqrt(jnp.maximum(var_t, 0.0))
                sd_p = jnp.sqrt(jnp.maximum(var_p, 0.0))
                ccc = (2.0 * cor * sd_t * sd_p) / (
                    var_t + var_p + (mean_t - mean_p) ** 2 + 1e-8)
                out[lt] = 1.0 - ccc
        elif lt == "Cosine":
            # F.cosine_embedding_loss with target = 1
            denom = (jnp.maximum(jnp.sqrt(stats["pp"]), 1e-8)
                     * jnp.maximum(jnp.sqrt(stats["tt"]), 1e-8))
            out[lt] = 1.0 - stats["pt"] / denom
    return out


def _as_flat_input(x):
    x = jnp.ravel(x)
    if not jnp.issubdtype(x.dtype, jnp.floating):
        x = x.astype(jnp.float32)
    return x


class RegressionLoss:
    """JAX/Pallas port of mmaction RegressionLoss (default loss_type='MSE')."""

    SUPPORTED = ("MSE", "MAE", "Huber", "LogCosh", "FMSE", "PCC", "CCC", "Cosine")
    # TODO(synk): BMC / MCCC / MPCC from the original config_dict are not ported.

    def __init__(self, loss_type="MSE", loss_weight=None,
                 min_pallas_elems=_MIN_PALLAS_ELEMS):
        self.loss_type = loss_type.split("+")
        for lt in self.loss_type:
            if lt not in self.SUPPORTED:
                raise NotImplementedError(
                    f"loss type '{lt}' not supported in the Pallas port")
        if loss_weight is None:
            self.loss_weight = [1.0 for _ in range(len(self.loss_type))]
        else:
            self.loss_weight = loss_weight
        needed = set()
        for lt in self.loss_type:
            needed.update(_LOSS_STATS[lt])
        self.needed = tuple(s for s in _STAT_ORDER if s in needed)  # static
        self.min_pallas_elems = min_pallas_elems

    def __call__(self, reg_score, label):
        pred = _as_flat_input(reg_score)
        target = _as_flat_input(label)
        n = pred.shape[0]
        stats = _compute_stats(pred, target, self.needed, self.min_pallas_elems)
        losses = _losses_from_stats(stats, n, self.loss_type)
        total = jnp.float32(0.0)
        for w, lt in zip(self.loss_weight, self.loss_type):
            total = total + jnp.float32(w) * losses[lt]
        return total


if __name__ == "__main__":
    key = jax.random.PRNGKey(0)
    k1, k2, k3, k4, k5, k6 = jax.random.split(key, 6)

    # 1) Typical mmaction regression head output [batch, 1]: tiny -> fused jnp path.
    small_score = jax.random.normal(k1, (16, 1), dtype=jnp.float32)
    small_label = jax.random.uniform(k2, (16, 1), dtype=jnp.float32)
    small_loss = RegressionLoss()(small_score, small_label)          # default 'MSE'
    jax.block_until_ready(small_loss)

    # 2) Aligned [256, 512] input (128K elems): default dispatch takes the Pallas
    #    streaming-reduction kernel (copy-free reshape, single-stat slab).
    mse_score = jax.random.normal(k3, (256, 512), dtype=jnp.float32)
    mse_label = jax.random.uniform(k4, (256, 512), dtype=jnp.float32)
    mse_loss = RegressionLoss()(mse_score, mse_label)
    jax.block_until_ready(mse_loss)

    # 3) Unaligned [500, 131] input, all eight supported losses; kernel path
    #    forced (min_pallas_elems=0) so ragged-tail handling is exercised.
    reg_score = jax.random.normal(k5, (500, 131), dtype=jnp.float32)
    label = jax.random.uniform(k6, (500, 131), dtype=jnp.float32)
    combo_types = "MSE+MAE+Huber+LogCosh+FMSE+PCC+CCC+Cosine"
    loss_pallas = RegressionLoss(combo_types, loss_weight=[1.0] * 8,
                                 min_pallas_elems=0)(reg_score, label)
    jax.block_until_ready(loss_pallas)

    # Cross-check the Pallas paths against the pure-jnp reference path.
    loss_ref = RegressionLoss(combo_types, loss_weight=[1.0] * 8,
                              min_pallas_elems=1 << 62)(reg_score, label)
    jax.block_until_ready(loss_ref)
    assert jnp.allclose(loss_pallas, loss_ref, rtol=1e-3, atol=1e-3), (
        float(loss_pallas), float(loss_ref))

    mse_ref = RegressionLoss(min_pallas_elems=1 << 62)(mse_score, mse_label)
    jax.block_until_ready(mse_ref)
    assert jnp.allclose(mse_loss, mse_ref, rtol=1e-3, atol=1e-3), (
        float(mse_loss), float(mse_ref))

    print("KERNEL_OK")
</pallas_src>

<mosaic_0001>
module attributes {stable_mosaic.version = 11 : i64} {
  func.func @_stats_kernel(%arg0: i32, %arg1: memref<1024x128xf32, #tpu.memory_space<vmem>>, %arg2: memref<1024x128xf32, #tpu.memory_space<vmem>>, %arg3: memref<1x8x128xf32, #tpu.memory_space<vmem>>) attributes {dimension_semantics = [#tpu.dimension_semantics<arbitrary>], iteration_bounds = array<i64: 1>, scalar_prefetch = 0 : i64, scratch_operands = 0 : i64, tpu.core_type = #tpu.core_type<tc>, window_params = [{transform_indices = @transform_0, window_bounds = array<i64: 1024, 128>}, {transform_indices = @transform_1, window_bounds = array<i64: 1024, 128>}, {pipeline_mode = #tpu.pipeline_mode<synchronous>, transform_indices = @transform_2, window_bounds = array<i64: 1, 8, 128>}]} {
    %c0_i32 = arith.constant 0 : i32
    %0 = arith.cmpi eq, %arg0, %c0_i32 : i32
    %1 = arith.extui %0 : i1 to i32
    %c0_i32_0 = arith.constant 0 : i32
    %2 = arith.cmpi ne, %1, %c0_i32_0 : i32
    scf.if %2 {
      %cst_10 = arith.constant 0.000000e+00 : f32
      %15 = vector.broadcast %cst_10 : f32 to vector<1x8x128xf32>
      %c0_11 = arith.constant 0 : index
      %c0_12 = arith.constant 0 : index
      %c0_13 = arith.constant 0 : index
      %16 = vector.load %arg3[%c0_11, %c0_12, %c0_13] : memref<1x8x128xf32, #tpu.memory_space<vmem>>, vector<1x8x128xf32>
      tpu.vector_store %arg3[%c0_11, %c0_12, %c0_13], %15 {strides = array<i32>} : memref<1x8x128xf32, #tpu.memory_space<vmem>>, vector<1x8x128xf32>,
    } else {
    }
    %c0 = arith.constant 0 : index
    %c0_1 = arith.constant 0 : index
    %3 = vector.load %arg1[%c0, %c0_1] : memref<1024x128xf32, #tpu.memory_space<vmem>>, vector<1024x128xf32>
    %c0_2 = arith.constant 0 : index
    %c0_3 = arith.constant 0 : index
    %4 = vector.load %arg2[%c0_2, %c0_3] : memref<1024x128xf32, #tpu.memory_space<vmem>>, vector<1024x128xf32>
    %5 = arith.subf %3, %4 : vector<1024x128xf32>
    %6 = arith.mulf %5, %5 : vector<1024x128xf32>
    %c0_4 = arith.constant 0 : index
    %c0_5 = arith.constant 0 : index
    %c0_6 = arith.constant 0 : index
    %7 = vector.load %arg3[%c0_4, %c0_5, %c0_6] : memref<1x8x128xf32, #tpu.memory_space<vmem>>, vector<1x8x128xf32>
    %8 = vector.shape_cast %7 : vector<1x8x128xf32> to vector<8x128xf32>
    %9 = vector.shape_cast %6 : vector<1024x128xf32> to vector<128x8x128xf32>
    %cst = arith.constant dense<0.000000e+00> : vector<8x128xf32>
    %10 = vector.multi_reduction <add>, %9, %cst [0] : vector<128x8x128xf32> to vector<8x128xf32>
    %11 = arith.addf %8, %10 : vector<8x128xf32>
    %c0_7 = arith.constant 0 : index
    %c0_8 = arith.constant 0 : index
    %c0_9 = arith.constant 0 : index
    %12 = vector.load %arg3[%c0_7, %c0_8, %c0_9] : memref<1x8x128xf32, #tpu.memory_space<vmem>>, vector<1x8x128xf32>
    %13 = vector.shape_cast %12 : vector<1x8x128xf32> to vector<8x128xf32>
    %14 = vector.shape_cast %11 : vector<8x128xf32> to vector<1x8x128xf32>
    tpu.vector_store %arg3[%c0_7, %c0_8, %c0_9], %14 {strides = array<i32>} : memref<1x8x128xf32, #tpu.memory_space<vmem>>, vector<1x8x128xf32>,
    return
  }
  func.func @transform_0(%arg0: i32) -> (i32, i32) {
    %c0_i32 = arith.constant 0 : i32
    %c0_i32_0 = arith.constant 0 : i32
    return %arg0, %c0_i32 : i32, i32
  }
  func.func @transform_1(%arg0: i32) -> (i32, i32) {
    %c0_i32 = arith.constant 0 : i32
    %c0_i32_0 = arith.constant 0 : i32
    return %arg0, %c0_i32 : i32, i32
  }
  func.func @transform_2(%arg0: i32) -> (i32, i32, i32) {
    %c0_i32 = arith.constant 0 : i32
    %c0_i32_0 = arith.constant 0 : i32
    %c0_i32_1 = arith.constant 0 : i32
    %c0_i32_2 = arith.constant 0 : i32
    return %c0_i32, %c0_i32_0, %c0_i32_1 : i32, i32, i32
  }
}

</mosaic_0001>

<llo_original>
// kernel: tpu_custom_call.1
$region0: #{tpu_custom_call.1}
  #allocation0 [shape = 'u32[]', space=smem, size = 0x4, offset = 0x4, fixed_abs, tag = 'smem constant byte address 0x4 - core index']
  #allocation1 [shape = 'u32[144,128]{1,0:T(1,128)}', space=vmem, size = 0x12000, scoped, tag = 'internal scratch']
  %s0 = inlined_call_operand.hbm [shape: f32[1024,128], index: 0, kind: input, shape index: {}]
  %s1 = inlined_call_operand.hbm [shape: f32[1024,128], index: 1, kind: input, shape index: {}]
  %s2 = inlined_call_operand.hbm [shape: f32[1,8,128], index: 2, kind: output, shape index: {}]
  %s3 = sld [smem:[#allocation0]]
  $region30: #{tpu_custom_call.1} parent=0
    _
  %s5 = ssub.s32 1, %s3
  %s6 = scalar_select 0, %s5, %s3
  $region1: #{tpu_custom_call.1} parent=0
    #allocation2 [shape = 'u8[524288]{0}', space=vmem, size = 0x80000, scoped, tag = 'input window, operand 0, single buffered']
    #allocation3 [shape = 's32[1]{0}', space=sflag, size = 0x4, scoped, tag = 'scoped memory for tpu_custom_call.1']
    #allocation4 [shape = 's32[1]{0}', space=sflag, size = 0x4, scoped, tag = 'scoped memory for tpu_custom_call.1']
    #allocation5 [shape = 'u8[524288]{0}', space=vmem, size = 0x80000, scoped, tag = 'input window, operand 1, single buffered']
    #allocation6 [shape = 's32[1]{0}', space=sflag, size = 0x4, scoped, tag = 'scoped memory for tpu_custom_call.1']
    #allocation7 [shape = 'u8[4096]{0}', space=vmem, size = 0x1000, scoped, tag = 'output window, operand 0, single buffered']
    %7 = vsyncpa [#allocation3], 0
    %8 = vsyncpa [#allocation6], 0
    %9 = vsyncpa [#allocation4], 0
    // Predicated region
    $region2: #{tpu_custom_call.1} parent=1 // pred_check
      _
    $region3: #{tpu_custom_call.1} parent=1 // pred_check_branch
      %11 = sbr.rel (0) target = $region5
    $region4: #{tpu_custom_call.1} parent=1 // pred_region
      %s13 = ssub.s32 16384, 16384
      %14 = vsyncadd [#allocation3], %s13
      %s15 = sshll.u32 [#allocation2], 4
      %s16 = int_to_ptr.vmem [resolvable:$true] %s15
      %21 = dma.hbm_to_vmem [thread:$0]  %s0, 16384, %s16, [#allocation3], 128, 128, 8
    $region5: #{tpu_custom_call.1} parent=1 // pred_fallthru
      _
    // Predicated region
    $region6: #{tpu_custom_call.1} parent=1 // pred_check
      _
    $region7: #{tpu_custom_call.1} parent=1 // pred_check_branch
      %23 = sbr.rel (0) target = $region9
    $region8: #{tpu_custom_call.1} parent=1 // pred_region
      %s25 = ssub.s32 16384, 16384
      %26 = vsyncadd [#allocation6], %s25
      %s27 = sshll.u32 [#allocation5], 4
      %s28 = int_to_ptr.vmem [resolvable:$true] %s27
      %33 = dma.hbm_to_vmem [thread:$0]  %s1, 16384, %s28, [#allocation6], 128, 128, 8
    $region9: #{tpu_custom_call.1} parent=1 // pred_fallthru
      _
    // Predicated region
    $region10: #{tpu_custom_call.1} parent=1 // pred_check
      _
    $region11: #{tpu_custom_call.1} parent=1 // pred_check_branch
      %35 = sbr.rel (0) target = $region13
    $region12: #{tpu_custom_call.1} parent=1 // pred_region
      %36 = dma.done [#allocation3], 16384
    $region13: #{tpu_custom_call.1} parent=1 // pred_fallthru
      _
    // Predicated region
    $region14: #{tpu_custom_call.1} parent=1 // pred_check
      _
    $region15: #{tpu_custom_call.1} parent=1 // pred_check_branch
      %38 = sbr.rel (0) target = $region17
    $region16: #{tpu_custom_call.1} parent=1 // pred_region
      %39 = dma.done [#allocation6], 16384
    $region17: #{tpu_custom_call.1} parent=1 // pred_fallthru
      _
    %p40 = scmp.eq.s32.totalorder 0, 0
    // Predicated region
    $region18: #{tpu_custom_call.1} parent=1 // pred_check
      %p41 = pneg %p40
    $region19: #{tpu_custom_call.1} parent=1 // pred_check_branch
      %43 = sbr.rel (%p41) target = $region21
    $region20: #{tpu_custom_call.1} parent=1 // pred_region
      %44 = vst [vmem:[#allocation7] sm:$0xff] 0.0
    $region21: #{tpu_custom_call.1} parent=1 // pred_fallthru
      _
    %v45 = vld [vmem:[#allocation2] sm:$0xff]
    %v46 = vld [vmem:[#allocation2 + $0x8] sm:$0xff]
    %v47 = vld [vmem:[#allocation2 + $0x10] sm:$0xff]
    %v48 = vld [vmem:[#allocation2 + $0x18] sm:$0xff]
    %v49 = vld [vmem:[#allocation2 + $0x20] sm:$0xff]
    %v50 = vld [vmem:[#allocation2 + $0x28] sm:$0xff]
    %v51 = vld [vmem:[#allocation2 + $0x30] sm:$0xff]
    %v52 = vld [vmem:[#allocation2 + $0x38] sm:$0xff]
    %v53 = vld [vmem:[#allocation2 + $0x40] sm:$0xff]
    %v54 = vld [vmem:[#allocation2 + $0x48] sm:$0xff]
    %v55 = vld [vmem:[#allocation2 + $0x50] sm:$0xff]
    %v56 = vld [vmem:[#allocation2 + $0x58] sm:$0xff]
    %v57 = vld [vmem:[#allocation2 + $0x60] sm:$0xff]
    %v58 = vld [vmem:[#allocation2 + $0x68] sm:$0xff]
    %v59 = vld [vmem:[#allocation2 + $0x70] sm:$0xff]
    %v60 = vld [vmem:[#allocation2 + $0x78] sm:$0xff]
    %v61 = vld [vmem:[#allocation2 + $0x80] sm:$0xff]
    %v62 = vld [vmem:[#allocation2 + $0x88] sm:$0xff]
    %v63 = vld [vmem:[#allocation2 + $0x90] sm:$0xff]
    %v64 = vld [vmem:[#allocation2 + $0x98] sm:$0xff]
    %v65 = vld [vmem:[#allocation2 + $0xa0] sm:$0xff]
    %v66 = vld [vmem:[#allocation2 + $0xa8] sm:$0xff]
    %v67 = vld [vmem:[#allocation2 + $0xb0] sm:$0xff]
    %v68 = vld [vmem:[#allocation2 + $0xb8] sm:$0xff]
    %v69 = vld [vmem:[#allocation2 + $0xc0] sm:$0xff]
    %v70 = vld [vmem:[#allocation2 + $0xc8] sm:$0xff]
    %v71 = vld [vmem:[#allocation2 + $0xd0] sm:$0xff]
    %v72 = vld [vmem:[#allocation2 + $0xd8] sm:$0xff]
    %v73 = vld [vmem:[#allocation2 + $0xe0] sm:$0xff]
    %v74 = vld [vmem:[#allocation2 + $0xe8] sm:$0xff]
    %v75 = vld [vmem:[#allocation2 + $0xf0] sm:$0xff]
    %v76 = vld [vmem:[#allocation2 + $0xf8] sm:$0xff]
    %v77 = vld [vmem:[#allocation2 + $0x100] sm:$0xff]
    %v78 = vld [vmem:[#allocation2 + $0x108] sm:$0xff]
    %v79 = vld [vmem:[#allocation2 + $0x110] sm:$0xff]
    %v80 = vld [vmem:[#allocation2 + $0x118] sm:$0xff]
    %v81 = vld [vmem:[#allocation2 + $0x120] sm:$0xff]
    %v82 = vld [vmem:[#allocation2 + $0x128] sm:$0xff]
    %v83 = vld [vmem:[#allocation2 + $0x130] sm:$0xff]
    %v84 = vld [vmem:[#allocation2 + $0x138] sm:$0xff]
    %v85 = vld [vmem:[#allocation2 + $0x140] sm:$0xff]
    %v86 = vld [vmem:[#allocation2 + $0x148] sm:$0xff]
    %v87 = vld [vmem:[#allocation2 + $0x150] sm:$0xff]
    %v88 = vld [vmem:[#allocation2 + $0x158] sm:$0xff]
    %v89 = vld [vmem:[#allocation2 + $0x160] sm:$0xff]
    %v90 = vld [vmem:[#allocation2 + $0x168] sm:$0xff]
    %v91 = vld [vmem:[#allocation2 + $0x170] sm:$0xff]
    %v92 = vld [vmem:[#allocation2 + $0x178] sm:$0xff]
    %v93 = vld [vmem:[#allocation2 + $0x180] sm:$0xff]
    %v94 = vld [vmem:[#allocation2 + $0x188] sm:$0xff]
    %v95 = vld [vmem:[#allocation2 + $0x190] sm:$0xff]
    %v96 = vld [vmem:[#allocation2 + $0x198] sm:$0xff]
    %v97 = vld [vmem:[#allocation2 + $0x1a0] sm:$0xff]
    %v98 = vld [vmem:[#allocation2 + $0x1a8] sm:$0xff]
    %v99 = vld [vmem:[#allocation2 + $0x1b0] sm:$0xff]
    %v100 = vld [vmem:[#allocation2 + $0x1b8] sm:$0xff]
    %v101 = vld [vmem:[#allocation2 + $0x1c0] sm:$0xff]
    %v102 = vld [vmem:[#allocation2 + $0x1c8] sm:$0xff]
    %v103 = vld [vmem:[#allocation2 + $0x1d0] sm:$0xff]
    %v104 = vld [vmem:[#allocation2 + $0x1d8] sm:$0xff]
    %v105 = vld [vmem:[#allocation2 + $0x1e0] sm:$0xff]
    %v106 = vld [vmem:[#allocation2 + $0x1e8] sm:$0xff]
    %v107 = vld [vmem:[#allocation2 + $0x1f0] sm:$0xff]
    %v108 = vld [vmem:[#allocation2 + $0x1f8] sm:$0xff]
    %v109 = vld [vmem:[#allocation2 + $0x200] sm:$0xff]
    %v110 = vld [vmem:[#allocation2 + $0x208] sm:$0xff]
    %v111 = vld [vmem:[#allocation2 + $0x210] sm:$0xff]
    %v112 = vld [vmem:[#allocation2 + $0x218] sm:$0xff]
    %v113 = vld [vmem:[#allocation2 + $0x220] sm:$0xff]
    %v114 = vld [vmem:[#allocation2 + $0x228] sm:$0xff]
    %v115 = vld [vmem:[#allocation2 + $0x230] sm:$0xff]
    %v116 = vld [vmem:[#allocation2 + $0x238] sm:$0xff]
    %v117 = vld [vmem:[#allocation2 + $0x240] sm:$0xff]
    %v118 = vld [vmem:[#allocation2 + $0x248] sm:$0xff]
    %v119 = vld [vmem:[#allocation2 + $0x250] sm:$0xff]
    %v120 = vld [vmem:[#allocation2 + $0x258] sm:$0xff]
    %v121 = vld [vmem:[#allocation2 + $0x260] sm:$0xff]
    %v122 = vld [vmem:[#allocation2 + $0x268] sm:$0xff]
    %v123 = vld [vmem:[#allocation2 + $0x270] sm:$0xff]
    %v124 = vld [vmem:[#allocation2 + $0x278] sm:$0xff]
    %v125 = vld [vmem:[#allocation2 + $0x280] sm:$0xff]
    %v126 = vld [vmem:[#allocation2 + $0x288] sm:$0xff]
    %v127 = vld [vmem:[#allocation2 + $0x290] sm:$0xff]
    %v128 = vld [vmem:[#allocation2 + $0x298] sm:$0xff]
    %v129 = vld [vmem:[#allocation2 + $0x2a0] sm:$0xff]
    %v130 = vld [vmem:[#allocation2 + $0x2a8] sm:$0xff]
    %v131 = vld [vmem:[#allocation2 + $0x2b0] sm:$0xff]
    %v132 = vld [vmem:[#allocation2 + $0x2b8] sm:$0xff]
    %v133 = vld [vmem:[#allocation2 + $0x2c0] sm:$0xff]
    %v134 = vld [vmem:[#allocation2 + $0x2c8] sm:$0xff]
    %v135 = vld [vmem:[#allocation2 + $0x2d0] sm:$0xff]
    %v136 = vld [vmem:[#allocation2 + $0x2d8] sm:$0xff]
    %v137 = vld [vmem:[#allocation2 + $0x2e0] sm:$0xff]
    %v138 = vld [vmem:[#allocation2 + $0x2e8] sm:$0xff]
    %v139 = vld [vmem:[#allocation2 + $0x2f0] sm:$0xff]
    %v140 = vld [vmem:[#allocation2 + $0x2f8] sm:$0xff]
    %v141 = vld [vmem:[#allocation2 + $0x300] sm:$0xff]
    %v142 = vld [vmem:[#allocation2 + $0x308] sm:$0xff]
    %v143 = vld [vmem:[#allocation2 + $0x310] sm:$0xff]
    %v144 = vld [vmem:[#allocation2 + $0x318] sm:$0xff]
    %v145 = vld [vmem:[#allocation2 + $0x320] sm:$0xff]
    %v146 = vld [vmem:[#allocation2 + $0x328] sm:$0xff]
    %v147 = vld [vmem:[#allocation2 + $0x330] sm:$0xff]
    %v148 = vld [vmem:[#allocation2 + $0x338] sm:$0xff]
    %v149 = vld [vmem:[#allocation2 + $0x340] sm:$0xff]
    %v150 = vld [vmem:[#allocation2 + $0x348] sm:$0xff]
    %v151 = vld [vmem:[#allocation2 + $0x350] sm:$0xff]
    %v152 = vld [vmem:[#allocation2 + $0x358] sm:$0xff]
    %v153 = vld [vmem:[#allocation2 + $0x360] sm:$0xff]
    %v154 = vld [vmem:[#allocation2 + $0x368] sm:$0xff]
    %v155 = vld [vmem:[#allocation2 + $0x370] sm:$0xff]
    %v156 = vld [vmem:[#allocation2 + $0x378] sm:$0xff]
    %v157 = vld [vmem:[#allocation2 + $0x380] sm:$0xff]
    %v158 = vld [vmem:[#allocation2 + $0x388] sm:$0xff]
    %v159 = vld [vmem:[#allocation2 + $0x390] sm:$0xff]
    %v160 = vld [vmem:[#allocation2 + $0x398] sm:$0xff]
    %v161 = vld [vmem:[#allocation2 + $0x3a0] sm:$0xff]
    %v162 = vld [vmem:[#allocation2 + $0x3a8] sm:$0xff]
    %v163 = vld [vmem:[#allocation2 + $0x3b0] sm:$0xff]
    %v164 = vld [vmem:[#allocation2 + $0x3b8] sm:$0xff]
    %v165 = vld [vmem:[#allocation2 + $0x3c0] sm:$0xff]
    %v166 = vld [vmem:[#allocation2 + $0x3c8] sm:$0xff]
    %v167 = vld [vmem:[#allocation2 + $0x3d0] sm:$0xff]
    %v168 = vld [vmem:[#allocation2 + $0x3d8] sm:$0xff]
    %v169 = vld [vmem:[#allocation2 + $0x3e0] sm:$0xff]
    %v170 = vld [vmem:[#allocation2 + $0x3e8] sm:$0xff]
    %v171 = vld [vmem:[#allocation2 + $0x3f0] sm:$0xff]
    %v172 = vld [vmem:[#allocation2 + $0x3f8] sm:$0xff]
    %v173 = vld [vmem:[#allocation5] sm:$0xff]
    %v174 = vld [vmem:[#allocation5 + $0x8] sm:$0xff]
    %v175 = vld [vmem:[#allocation5 + $0x10] sm:$0xff]
    %v176 = vld [vmem:[#allocation5 + $0x18] sm:$0xff]
    %v177 = vld [vmem:[#allocation5 + $0x20] sm:$0xff]
    %v178 = vld [vmem:[#allocation5 + $0x28] sm:$0xff]
    %v179 = vld [vmem:[#allocation5 + $0x30] sm:$0xff]
    %v180 = vld [vmem:[#allocation5 + $0x38] sm:$0xff]
    %v181 = vld [vmem:[#allocation5 + $0x40] sm:$0xff]
    %v182 = vld [vmem:[#allocation5 + $0x48] sm:$0xff]
    %v183 = vld [vmem:[#allocation5 + $0x50] sm:$0xff]
    %v184 = vld [vmem:[#allocation5 + $0x58] sm:$0xff]
    %v185 = vld [vmem:[#allocation5 + $0x60] sm:$0xff]
    %v186 = vld [vmem:[#allocation5 + $0x68] sm:$0xff]
    %v187 = vld [vmem:[#allocation5 + $0x70] sm:$0xff]
    %v188 = vld [vmem:[#allocation5 + $0x78] sm:$0xff]
    %v189 = vld [vmem:[#allocation5 + $0x80] sm:$0xff]
    %v190 = vld [vmem:[#allocation5 + $0x88] sm:$0xff]
    %v191 = vld [vmem:[#allocation5 + $0x90] sm:$0xff]
    %v192 = vld [vmem:[#allocation5 + $0x98] sm:$0xff]
    %v193 = vld [vmem:[#allocation5 + $0xa0] sm:$0xff]
    %v194 = vld [vmem:[#allocation5 + $0xa8] sm:$0xff]
    %v195 = vld [vmem:[#allocation5 + $0xb0] sm:$0xff]
    %v196 = vld [vmem:[#allocation5 + $0xb8] sm:$0xff]
    %v197 = vld [vmem:[#allocation5 + $0xc0] sm:$0xff]
    %v198 = vld [vmem:[#allocation5 + $0xc8] sm:$0xff]
    %v199 = vld [vmem:[#allocation5 + $0xd0] sm:$0xff]
    %v200 = vld [vmem:[#allocation5 + $0xd8] sm:$0xff]
    %v201 = vld [vmem:[#allocation5 + $0xe0] sm:$0xff]
    %v202 = vld [vmem:[#allocation5 + $0xe8] sm:$0xff]
    %v203 = vld [vmem:[#allocation5 + $0xf0] sm:$0xff]
    %v204 = vld [vmem:[#allocation5 + $0xf8] sm:$0xff]
    %v205 = vld [vmem:[#allocation5 + $0x100] sm:$0xff]
    %v206 = vld [vmem:[#allocation5 + $0x108] sm:$0xff]
    %v207 = vld [vmem:[#allocation5 + $0x110] sm:$0xff]
    %v208 = vld [vmem:[#allocation5 + $0x118] sm:$0xff]
    %v209 = vld [vmem:[#allocation5 + $0x120] sm:$0xff]
    %v210 = vld [vmem:[#allocation5 + $0x128] sm:$0xff]
    %v211 = vld [vmem:[#allocation5 + $0x130] sm:$0xff]
    %v212 = vld [vmem:[#allocation5 + $0x138] sm:$0xff]
    %v213 = vld [vmem:[#allocation5 + $0x140] sm:$0xff]
    %v214 = vld [vmem:[#allocation5 + $0x148] sm:$0xff]
    %v215 = vld [vmem:[#allocation5 + $0x150] sm:$0xff]
    %v216 = vld [vmem:[#allocation5 + $0x158] sm:$0xff]
    %v217 = vld [vmem:[#allocation5 + $0x160] sm:$0xff]
    %v218 = vld [vmem:[#allocation5 + $0x168] sm:$0xff]
    %v219 = vld [vmem:[#allocation5 + $0x170] sm:$0xff]
    %v220 = vld [vmem:[#allocation5 + $0x178] sm:$0xff]
    %v221 = vld [vmem:[#allocation5 + $0x180] sm:$0xff]
    %v222 = vld [vmem:[#allocation5 + $0x188] sm:$0xff]
    %v223 = vld [vmem:[#allocation5 + $0x190] sm:$0xff]
    %v224 = vld [vmem:[#allocation5 + $0x198] sm:$0xff]
    %v225 = vld [vmem:[#allocation5 + $0x1a0] sm:$0xff]
    %v226 = vld [vmem:[#allocation5 + $0x1a8] sm:$0xff]
    %v227 = vld [vmem:[#allocation5 + $0x1b0] sm:$0xff]
    %v228 = vld [vmem:[#allocation5 + $0x1b8] sm:$0xff]
    %v229 = vld [vmem:[#allocation5 + $0x1c0] sm:$0xff]
    %v230 = vld [vmem:[#allocation5 + $0x1c8] sm:$0xff]
    %v231 = vld [vmem:[#allocation5 + $0x1d0] sm:$0xff]
    %v232 = vld [vmem:[#allocation5 + $0x1d8] sm:$0xff]
    %v233 = vld [vmem:[#allocation5 + $0x1e0] sm:$0xff]
    %v234 = vld [vmem:[#allocation5 + $0x1e8] sm:$0xff]
    %v235 = vld [vmem:[#allocation5 + $0x1f0] sm:$0xff]
    %v236 = vld [vmem:[#allocation5 + $0x1f8] sm:$0xff]
    %v237 = vld [vmem:[#allocation5 + $0x200] sm:$0xff]
    %v238 = vld [vmem:[#allocation5 + $0x208] sm:$0xff]
    %v239 = vld [vmem:[#allocation5 + $0x210] sm:$0xff]
    %v240 = vld [vmem:[#allocation5 + $0x218] sm:$0xff]
    %v241 = vld [vmem:[#allocation5 + $0x220] sm:$0xff]
    %v242 = vld [vmem:[#allocation5 + $0x228] sm:$0xff]
    %v243 = vld [vmem:[#allocation5 + $0x230] sm:$0xff]
    %v244 = vld [vmem:[#allocation5 + $0x238] sm:$0xff]
    %v245 = vld [vmem:[#allocation5 + $0x240] sm:$0xff]
    %v246 = vld [vmem:[#allocation5 + $0x248] sm:$0xff]
    %v247 = vld [vmem:[#allocation5 + $0x250] sm:$0xff]
    %v248 = vld [vmem:[#allocation5 + $0x258] sm:$0xff]
    %v249 = vld [vmem:[#allocation5 + $0x260] sm:$0xff]
    %v250 = vld [vmem:[#allocation5 + $0x268] sm:$0xff]
    %v251 = vld [vmem:[#allocation5 + $0x270] sm:$0xff]
    %v252 = vld [vmem:[#allocation5 + $0x278] sm:$0xff]
    %v253 = vld [vmem:[#allocation5 + $0x280] sm:$0xff]
    %v254 = vld [vmem:[#allocation5 + $0x288] sm:$0xff]
    %v255 = vld [vmem:[#allocation5 + $0x290] sm:$0xff]
    %v256 = vld [vmem:[#allocation5 + $0x298] sm:$0xff]
    %v257 = vld [vmem:[#allocation5 + $0x2a0] sm:$0xff]
    %v258 = vld [vmem:[#allocation5 + $0x2a8] sm:$0xff]
    %v259 = vld [vmem:[#allocation5 + $0x2b0] sm:$0xff]
    %v260 = vld [vmem:[#allocation5 + $0x2b8] sm:$0xff]
    %v261 = vld [vmem:[#allocation5 + $0x2c0] sm:$0xff]
    %v262 = vld [vmem:[#allocation5 + $0x2c8] sm:$0xff]
    %v263 = vld [vmem:[#allocation5 + $0x2d0] sm:$0xff]
    %v264 = vld [vmem:[#allocation5 + $0x2d8] sm:$0xff]
    %v265 = vld [vmem:[#allocation5 + $0x2e0] sm:$0xff]
    %v266 = vld [vmem:[#allocation5 + $0x2e8] sm:$0xff]
    %v267 = vld [vmem:[#allocation5 + $0x2f0] sm:$0xff]
    %v268 = vld [vmem:[#allocation5 + $0x2f8] sm:$0xff]
    %v269 = vld [vmem:[#allocation5 + $0x300] sm:$0xff]
    %v270 = vld [vmem:[#allocation5 + $0x308] sm:$0xff]
    %v271 = vld [vmem:[#allocation5 + $0x310] sm:$0xff]
    %v272 = vld [vmem:[#allocation5 + $0x318] sm:$0xff]
    %v273 = vld [vmem:[#allocation5 + $0x320] sm:$0xff]
    %v274 = vld [vmem:[#allocation5 + $0x328] sm:$0xff]
    %v275 = vld [vmem:[#allocation5 + $0x330] sm:$0xff]
    %v276 = vld [vmem:[#allocation5 + $0x338] sm:$0xff]
    %v277 = vld [vmem:[#allocation5 + $0x340] sm:$0xff]
    %v278 = vld [vmem:[#allocation5 + $0x348] sm:$0xff]
    %v279 = vld [vmem:[#allocation5 + $0x350] sm:$0xff]
    %v280 = vld [vmem:[#allocation5 + $0x358] sm:$0xff]
    %v281 = vld [vmem:[#allocation5 + $0x360] sm:$0xff]
    %v282 = vld [vmem:[#allocation5 + $0x368] sm:$0xff]
    %v283 = vld [vmem:[#allocation5 + $0x370] sm:$0xff]
    %v284 = vld [vmem:[#allocation5 + $0x378] sm:$0xff]
    %v285 = vld [vmem:[#allocation5 + $0x380] sm:$0xff]
    %v286 = vld [vmem:[#allocation5 + $0x388] sm:$0xff]
    %v287 = vld [vmem:[#allocation5 + $0x390] sm:$0xff]
    %v288 = vld [vmem:[#allocation5 + $0x398] sm:$0xff]
    %v289 = vld [vmem:[#allocation5 + $0x3a0] sm:$0xff]
    %v290 = vld [vmem:[#allocation5 + $0x3a8] sm:$0xff]
    %v291 = vld [vmem:[#allocation5 + $0x3b0] sm:$0xff]
    %v292 = vld [vmem:[#allocation5 + $0x3b8] sm:$0xff]
    %v293 = vld [vmem:[#allocation5 + $0x3c0] sm:$0xff]
    %v294 = vld [vmem:[#allocation5 + $0x3c8] sm:$0xff]
    %v295 = vld [vmem:[#allocation5 + $0x3d0] sm:$0xff]
    %v296 = vld [vmem:[#allocation5 + $0x3d8] sm:$0xff]
    %v297 = vld [vmem:[#allocation5 + $0x3e0] sm:$0xff]
    %v298 = vld [vmem:[#allocation5 + $0x3e8] sm:$0xff]
    %v299 = vld [vmem:[#allocation5 + $0x3f0] sm:$0xff]
    %v300 = vld [vmem:[#allocation5 + $0x3f8] sm:$0xff]
    %v301 = vsub.f32 %v45, %v173
    %v302 = vsub.f32 %v46, %v174
    %v303 = vsub.f32 %v47, %v175
    %v304 = vsub.f32 %v48, %v176
    %v305 = vsub.f32 %v49, %v177
    %v306 = vsub.f32 %v50, %v178
    %v307 = vsub.f32 %v51, %v179
    %v308 = vsub.f32 %v52, %v180
    %v309 = vsub.f32 %v53, %v181
    %v310 = vsub.f32 %v54, %v182
    %v311 = vsub.f32 %v55, %v183
    %v312 = vsub.f32 %v56, %v184
    %v313 = vsub.f32 %v57, %v185
    %v314 = vsub.f32 %v58, %v186
    %v315 = vsub.f32 %v59, %v187
    %v316 = vsub.f32 %v60, %v188
    %v317 = vsub.f32 %v61, %v189
    %v318 = vsub.f32 %v62, %v190
    %v319 = vsub.f32 %v63, %v191
    %v320 = vsub.f32 %v64, %v192
    %v321 = vsub.f32 %v65, %v193
    %v322 = vsub.f32 %v66, %v194
    %v323 = vsub.f32 %v67, %v195
    %v324 = vsub.f32 %v68, %v196
    %v325 = vsub.f32 %v69, %v197
    %v326 = vsub.f32 %v70, %v198
    %v327 = vsub.f32 %v71, %v199
    %v328 = vsub.f32 %v72, %v200
    %v329 = vsub.f32 %v73, %v201
    %v330 = vsub.f32 %v74, %v202
    %v331 = vsub.f32 %v75, %v203
    %v332 = vsub.f32 %v76, %v204
    %v333 = vsub.f32 %v77, %v205
    %v334 = vsub.f32 %v78, %v206
    %v335 = vsub.f32 %v79, %v207
    %v336 = vsub.f32 %v80, %v208
    %v337 = vsub.f32 %v81, %v209
    %v338 = vsub.f32 %v82, %v210
    %v339 = vsub.f32 %v83, %v211
    %v340 = vsub.f32 %v84, %v212
    %v341 = vsub.f32 %v85, %v213
    %v342 = vsub.f32 %v86, %v214
    %v343 = vsub.f32 %v87, %v215
    %v344 = vsub.f32 %v88, %v216
    %v345 = vsub.f32 %v89, %v217
    %v346 = vsub.f32 %v90, %v218
    %v347 = vsub.f32 %v91, %v219
    %v348 = vsub.f32 %v92, %v220
    %v349 = vsub.f32 %v93, %v221
    %v350 = vsub.f32 %v94, %v222
    %v351 = vsub.f32 %v95, %v223
    %v352 = vsub.f32 %v96, %v224
    %v353 = vsub.f32 %v97, %v225
    %v354 = vsub.f32 %v98, %v226
    %v355 = vsub.f32 %v99, %v227
    %v356 = vsub.f32 %v100, %v228
    %v357 = vsub.f32 %v101, %v229
    %v358 = vsub.f32 %v102, %v230
    %v359 = vsub.f32 %v103, %v231
    %v360 = vsub.f32 %v104, %v232
    %v361 = vsub.f32 %v105, %v233
    %v362 = vsub.f32 %v106, %v234
    %v363 = vsub.f32 %v107, %v235
    %v364 = vsub.f32 %v108, %v236
    %v365 = vsub.f32 %v109, %v237
    %v366 = vsub.f32 %v110, %v238
    %v367 = vsub.f32 %v111, %v239
    %v368 = vsub.f32 %v112, %v240
    %v369 = vsub.f32 %v113, %v241
    %v370 = vsub.f32 %v114, %v242
    %v371 = vsub.f32 %v115, %v243
    %v372 = vsub.f32 %v116, %v244
    %v373 = vsub.f32 %v117, %v245
    %v374 = vsub.f32 %v118, %v246
    %v375 = vsub.f32 %v119, %v247
    %v376 = vsub.f32 %v120, %v248
    %v377 = vsub.f32 %v121, %v249
    %v378 = vsub.f32 %v122, %v250
    %v379 = vsub.f32 %v123, %v251
    %v380 = vsub.f32 %v124, %v252
    %v381 = vsub.f32 %v125, %v253
    %v382 = vsub.f32 %v126, %v254
    %v383 = vsub.f32 %v127, %v255
    %v384 = vsub.f32 %v128, %v256
    %v385 = vsub.f32 %v129, %v257
    %v386 = vsub.f32 %v130, %v258
    %v387 = vsub.f32 %v131, %v259
    %v388 = vsub.f32 %v132, %v260
    %v389 = vsub.f32 %v133, %v261
    %v390 = vsub.f32 %v134, %v262
    %v391 = vsub.f32 %v135, %v263
    %v392 = vsub.f32 %v136, %v264
    %v393 = vsub.f32 %v137, %v265
    %v394 = vsub.f32 %v138, %v266
    %v395 = vsub.f32 %v139, %v267
    %v396 = vsub.f32 %v140, %v268
    %v397 = vsub.f32 %v141, %v269
    %v398 = vsub.f32 %v142, %v270
    %v399 = vsub.f32 %v143, %v271
    %v400 = vsub.f32 %v144, %v272
    %v401 = vsub.f32 %v145, %v273
    %v402 = vsub.f32 %v146, %v274
    %v403 = vsub.f32 %v147, %v275
    %v404 = vsub.f32 %v148, %v276
    %v405 = vsub.f32 %v149, %v277
    %v406 = vsub.f32 %v150, %v278
    %v407 = vsub.f32 %v151, %v279
    %v408 = vsub.f32 %v152, %v280
    %v409 = vsub.f32 %v153, %v281
    %v410 = vsub.f32 %v154, %v282
    %v411 = vsub.f32 %v155, %v283
    %v412 = vsub.f32 %v156, %v284
    %v413 = vsub.f32 %v157, %v285
    %v414 = vsub.f32 %v158, %v286
    %v415 = vsub.f32 %v159, %v287
    %v416 = vsub.f32 %v160, %v288
    %v417 = vsub.f32 %v161, %v289
    %v418 = vsub.f32 %v162, %v290
    %v419 = vsub.f32 %v163, %v291
    %v420 = vsub.f32 %v164, %v292
    %v421 = vsub.f32 %v165, %v293
    %v422 = vsub.f32 %v166, %v294
    %v423 = vsub.f32 %v167, %v295
    %v424 = vsub.f32 %v168, %v296
    %v425 = vsub.f32 %v169, %v297
    %v426 = vsub.f32 %v170, %v298
    %v427 = vsub.f32 %v171, %v299
    %v428 = vsub.f32 %v172, %v300
    %v429 = vmul.f32 %v301, %v301
    %v430 = vmul.f32 %v302, %v302
    %v431 = vmul.f32 %v303, %v303
    %v432 = vmul.f32 %v304, %v304
    %v433 = vmul.f32 %v305, %v305
    %v434 = vmul.f32 %v306, %v306
    %v435 = vmul.f32 %v307, %v307
    %v436 = vmul.f32 %v308, %v308
    %v437 = vmul.f32 %v309, %v309
    %v438 = vmul.f32 %v310, %v310
    %v439 = vmul.f32 %v311, %v311
    %v440 = vmul.f32 %v312, %v312
    %v441 = vmul.f32 %v313, %v313
    %v442 = vmul.f32 %v314, %v314
    %v443 = vmul.f32 %v315, %v315
    %v444 = vmul.f32 %v316, %v316
    %v445 = vmul.f32 %v317, %v317
    %v446 = vmul.f32 %v318, %v318
    %v447 = vmul.f32 %v319, %v319
    %v448 = vmul.f32 %v320, %v320
    %v449 = vmul.f32 %v321, %v321
    %v450 = vmul.f32 %v322, %v322
    %v451 = vmul.f32 %v323, %v323
    %v452 = vmul.f32 %v324, %v324
    %v453 = vmul.f32 %v325, %v325
    %v454 = vmul.f32 %v326, %v326
    %v455 = vmul.f32 %v327, %v327
    %v456 = vmul.f32 %v328, %v328
    %v457 = vmul.f32 %v329, %v329
    %v458 = vmul.f32 %v330, %v330
    %v459 = vmul.f32 %v331, %v331
    %v460 = vmul.f32 %v332, %v332
    %v461 = vmul.f32 %v333, %v333
    %v462 = vmul.f32 %v334, %v334
    %v463 = vmul.f32 %v335, %v335
    %v464 = vmul.f32 %v336, %v336
    %v465 = vmul.f32 %v337, %v337
    %v466 = vmul.f32 %v338, %v338
    %v467 = vmul.f32 %v339, %v339
    %v468 = vmul.f32 %v340, %v340
    %v469 = vmul.f32 %v341, %v341
    %v470 = vmul.f32 %v342, %v342
    %v471 = vmul.f32 %v343, %v343
    %v472 = vmul.f32 %v344, %v344
    %v473 = vmul.f32 %v345, %v345
    %v474 = vmul.f32 %v346, %v346
    %v475 = vmul.f32 %v347, %v347
    %v476 = vmul.f32 %v348, %v348
    %v477 = vmul.f32 %v349, %v349
    %v478 = vmul.f32 %v350, %v350
    %v479 = vmul.f32 %v351, %v351
    %v480 = vmul.f32 %v352, %v352
    %v481 = vmul.f32 %v353, %v353
    %v482 = vmul.f32 %v354, %v354
    %v483 = vmul.f32 %v355, %v355
    %v484 = vmul.f32 %v356, %v356
    %v485 = vmul.f32 %v357, %v357
    %v486 = vmul.f32 %v358, %v358
    %v487 = vmul.f32 %v359, %v359
    %v488 = vmul.f32 %v360, %v360
    %v489 = vmul.f32 %v361, %v361
    %v490 = vmul.f32 %v362, %v362
    %v491 = vmul.f32 %v363, %v363
    %v492 = vmul.f32 %v364, %v364
    %v493 = vmul.f32 %v365, %v365
    %v494 = vmul.f32 %v366, %v366
    %v495 = vmul.f32 %v367, %v367
    %v496 = vmul.f32 %v368, %v368
    %v497 = vmul.f32 %v369, %v369
    %v498 = vmul.f32 %v370, %v370
    %v499 = vmul.f32 %v371, %v371
    %v500 = vmul.f32 %v372, %v372
    %v501 = vmul.f32 %v373, %v373
    %v502 = vmul.f32 %v374, %v374
    %v503 = vmul.f32 %v375, %v375
    %v504 = vmul.f32 %v376, %v376
    %v505 = vmul.f32 %v377, %v377
    %v506 = vmul.f32 %v378, %v378
    %v507 = vmul.f32 %v379, %v379
    %v508 = vmul.f32 %v380, %v380
    %v509 = vmul.f32 %v381, %v381
    %v510 = vmul.f32 %v382, %v382
    %v511 = vmul.f32 %v383, %v383
    %v512 = vmul.f32 %v384, %v384
    %v513 = vmul.f32 %v385, %v385
    %v514 = vmul.f32 %v386, %v386
    %v515 = vmul.f32 %v387, %v387
    %v516 = vmul.f32 %v388, %v388
    %v517 = vmul.f32 %v389, %v389
    %v518 = vmul.f32 %v390, %v390
    %v519 = vmul.f32 %v391, %v391
    %v520 = vmul.f32 %v392, %v392
    %v521 = vmul.f32 %v393, %v393
    %v522 = vmul.f32 %v394, %v394
    %v523 = vmul.f32 %v395, %v395
    %v524 = vmul.f32 %v396, %v396
    %v525 = vmul.f32 %v397, %v397
    %v526 = vmul.f32 %v398, %v398
    %v527 = vmul.f32 %v399, %v399
    %v528 = vmul.f32 %v400, %v400
    %v529 = vmul.f32 %v401, %v401
    %v530 = vmul.f32 %v402, %v402
    %v531 = vmul.f32 %v403, %v403
    %v532 = vmul.f32 %v404, %v404
    %v533 = vmul.f32 %v405, %v405
    %v534 = vmul.f32 %v406, %v406
    %v535 = vmul.f32 %v407, %v407
    %v536 = vmul.f32 %v408, %v408
    %v537 = vmul.f32 %v409, %v409
    %v538 = vmul.f32 %v410, %v410
    %v539 = vmul.f32 %v411, %v411
    %v540 = vmul.f32 %v412, %v412
    %v541 = vmul.f32 %v413, %v413
    %v542 = vmul.f32 %v414, %v414
    %v543 = vmul.f32 %v415, %v415
    %v544 = vmul.f32 %v416, %v416
    %v545 = vmul.f32 %v417, %v417
    %v546 = vmul.f32 %v418, %v418
    %v547 = vmul.f32 %v419, %v419
    %v548 = vmul.f32 %v420, %v420
    %v549 = vmul.f32 %v421, %v421
    %v550 = vmul.f32 %v422, %v422
    %v551 = vmul.f32 %v423, %v423
    %v552 = vmul.f32 %v424, %v424
    %v553 = vmul.f32 %v425, %v425
    %v554 = vmul.f32 %v426, %v426
    %v555 = vmul.f32 %v427, %v427
    %v556 = vmul.f32 %v428, %v428
    %v557 = vld [vmem:[#allocation7] sm:$0xff]
    %v558 = vadd.f32 %v429, %v430
    %v559 = vadd.f32 %v558, %v431
    %v560 = vadd.f32 %v559, %v432
    %v561 = vadd.f32 %v560, %v433
    %v562 = vadd.f32 %v561, %v434
    %v563 = vadd.f32 %v562, %v435
    %v564 = vadd.f32 %v563, %v436
    %v565 = vadd.f32 %v564, %v437
    %v566 = vadd.f32 %v565, %v438
    %v567 = vadd.f32 %v566, %v439
    %v568 = vadd.f32 %v567, %v440
    %v569 = vadd.f32 %v568, %v441
    %v570 = vadd.f32 %v569, %v442
    %v571 = vadd.f32 %v570, %v443
    %v572 = vadd.f32 %v571, %v444
    %v573 = vadd.f32 %v572, %v445
    %v574 = vadd.f32 %v573, %v446
    %v575 = vadd.f32 %v574, %v447
    %v576 = vadd.f32 %v575, %v448
    %v577 = vadd.f32 %v576, %v449
    %v578 = vadd.f32 %v577, %v450
    %v579 = vadd.f32 %v578, %v451
    %v580 = vadd.f32 %v579, %v452
    %v581 = vadd.f32 %v580, %v453
    %v582 = vadd.f32 %v581, %v454
    %v583 = vadd.f32 %v582, %v455
    %v584 = vadd.f32 %v583, %v456
    %v585 = vadd.f32 %v584, %v457
    %v586 = vadd.f32 %v585, %v458
    %v587 = vadd.f32 %v586, %v459
    %v588 = vadd.f32 %v587, %v460
    %v589 = vadd.f32 %v588, %v461
    %v590 = vadd.f32 %v589, %v462
    %v591 = vadd.f32 %v590, %v463
    %v592 = vadd.f32 %v591, %v464
    %v593 = vadd.f32 %v592, %v465
    %v594 = vadd.f32 %v593, %v466
    %v595 = vadd.f32 %v594, %v467
    %v596 = vadd.f32 %v595, %v468
    %v597 = vadd.f32 %v596, %v469
    %v598 = vadd.f32 %v597, %v470
    %v599 = vadd.f32 %v598, %v471
    %v600 = vadd.f32 %v599, %v472
    %v601 = vadd.f32 %v600, %v473
    %v602 = vadd.f32 %v601, %v474
    %v603 = vadd.f32 %v602, %v475
    %v604 = vadd.f32 %v603, %v476
    %v605 = vadd.f32 %v604, %v477
    %v606 = vadd.f32 %v605, %v478
    %v607 = vadd.f32 %v606, %v479
    %v608 = vadd.f32 %v607, %v480
    %v609 = vadd.f32 %v608, %v481
    %v610 = vadd.f32 %v609, %v482
    %v611 = vadd.f32 %v610, %v483
    %v612 = vadd.f32 %v611, %v484
    %v613 = vadd.f32 %v612, %v485
    %v614 = vadd.f32 %v613, %v486
    %v615 = vadd.f32 %v614, %v487
    %v616 = vadd.f32 %v615, %v488
    %v617 = vadd.f32 %v616, %v489
    %v618 = vadd.f32 %v617, %v490
    %v619 = vadd.f32 %v618, %v491
    %v620 = vadd.f32 %v619, %v492
    %v621 = vadd.f32 %v620, %v493
    %v622 = vadd.f32 %v621, %v494
    %v623 = vadd.f32 %v622, %v495
    %v624 = vadd.f32 %v623, %v496
    %v625 = vadd.f32 %v624, %v497
    %v626 = vadd.f32 %v625, %v498
    %v627 = vadd.f32 %v626, %v499
    %v628 = vadd.f32 %v627, %v500
    %v629 = vadd.f32 %v628, %v501
    %v630 = vadd.f32 %v629, %v502
    %v631 = vadd.f32 %v630, %v503
    %v632 = vadd.f32 %v631, %v504
    %v633 = vadd.f32 %v632, %v505
    %v634 = vadd.f32 %v633, %v506
    %v635 = vadd.f32 %v634, %v507
    %v636 = vadd.f32 %v635, %v508
    %v637 = vadd.f32 %v636, %v509
    %v638 = vadd.f32 %v637, %v510
    %v639 = vadd.f32 %v638, %v511
    %v640 = vadd.f32 %v639, %v512
    %v641 = vadd.f32 %v640, %v513
    %v642 = vadd.f32 %v641, %v514
    %v643 = vadd.f32 %v642, %v515
    %v644 = vadd.f32 %v643, %v516
    %v645 = vadd.f32 %v644, %v517
    %v646 = vadd.f32 %v645, %v518
    %v647 = vadd.f32 %v646, %v519
    %v648 = vadd.f32 %v647, %v520
    %v649 = vadd.f32 %v648, %v521
    %v650 = vadd.f32 %v649, %v522
    %v651 = vadd.f32 %v650, %v523
    %v652 = vadd.f32 %v651, %v524
    %v653 = vadd.f32 %v652, %v525
    %v654 = vadd.f32 %v653, %v526
    %v655 = vadd.f32 %v654, %v527
    %v656 = vadd.f32 %v655, %v528
    %v657 = vadd.f32 %v656, %v529
    %v658 = vadd.f32 %v657, %v530
    %v659 = vadd.f32 %v658, %v531
    %v660 = vadd.f32 %v659, %v532
    %v661 = vadd.f32 %v660, %v533
    %v662 = vadd.f32 %v661, %v534
    %v663 = vadd.f32 %v662, %v535
    %v664 = vadd.f32 %v663, %v536
    %v665 = vadd.f32 %v664, %v537
    %v666 = vadd.f32 %v665, %v538
    %v667 = vadd.f32 %v666, %v539
    %v668 = vadd.f32 %v667, %v540
    %v669 = vadd.f32 %v668, %v541
    %v670 = vadd.f32 %v669, %v542
    %v671 = vadd.f32 %v670, %v543
    %v672 = vadd.f32 %v671, %v544
    %v673 = vadd.f32 %v672, %v545
    %v674 = vadd.f32 %v673, %v546
    %v675 = vadd.f32 %v674, %v547
    %v676 = vadd.f32 %v675, %v548
    %v677 = vadd.f32 %v676, %v549
    %v678 = vadd.f32 %v677, %v550
    %v679 = vadd.f32 %v678, %v551
    %v680 = vadd.f32 %v679, %v552
    %v681 = vadd.f32 %v680, %v553
    %v682 = vadd.f32 %v681, %v554
    %v683 = vadd.f32 %v682, %v555
    %v684 = vadd.f32 %v683, %v556
    %v685 = vadd.f32 %v557, %v684
    %686 = vst [vmem:[#allocation7] sm:$0xff] %v685
    // Predicated region
    $region22: #{tpu_custom_call.1} parent=1 // pred_check
      _
    $region23: #{tpu_custom_call.1} parent=1 // pred_check_branch
      %688 = sbr.rel (0) target = $region25
    $region24: #{tpu_custom_call.1} parent=1 // pred_region
      %s690 = ssub.s32 128, 128
      %691 = vsyncadd [#allocation4], %s690
      %s693 = sshll.u32 [#allocation7], 4
      %s694 = int_to_ptr.vmem [resolvable:$true] %s693
      %696 = dma.vmem_to_hbm [thread:$0]  %s694, 128, %s2, [#allocation4]
    $region25: #{tpu_custom_call.1} parent=1 // pred_fallthru
      _
    // Predicated region
    $region26: #{tpu_custom_call.1} parent=1 // pred_check
      _
    $region27: #{tpu_custom_call.1} parent=1 // pred_check_branch
      %698 = sbr.rel (0) target = $region29
    $region28: #{tpu_custom_call.1} parent=1 // pred_region
      %699 = dma.done [#allocation4], 128
    $region29: #{tpu_custom_call.1} parent=1 // pred_fallthru
      _
    %700 = vsyncpa [#allocation3], 1
    %701 = vsyncpa [#allocation6], 1
    %702 = vsyncpa [#allocation4], 1

</llo_original>
